<compile_context>
chip_gen: v6e
topology: v6e:2x2x1
jax: 0.10.0
libtpu: 0.0.40
codegen_flags: <defaults>
</compile_context>

<pallas_src>
import functools

import jax
import jax.numpy as jnp
import numpy as np
from jax.experimental import pallas as pl
from jax.experimental.pallas import tpu as pltpu


def _round_up(x, m):
    return ((x + m - 1) // m) * m


# ---------------------------------------------------------------------------
# Pallas kernel: tiled (patches @ Wflat) with f32 accumulator, bias on last K
# ---------------------------------------------------------------------------
def _gemm_bias_kernel(p_ref, w_ref, b_ref, o_ref, acc_ref):
    # p_ref : (TM, TK)   im2col patch tile
    # w_ref : (TK, TN)   flattened conv-weight tile
    # b_ref : (1,  TN)   bias tile (broadcast over rows)
    # o_ref : (TM, TN)   output tile
    # acc_ref: (TM, TN)  f32 accumulator scratch (lives across the K axis)
    k = pl.program_id(2)

    @pl.when(k == 0)
    def _():
        acc_ref[...] = jnp.zeros_like(acc_ref)

    acc_ref[...] += jnp.dot(p_ref[...], w_ref[...],
                            preferred_element_type=jnp.float32)

    @pl.when(k == pl.num_programs(2) - 1)
    def _():
        o_ref[...] = (acc_ref[...] + b_ref[...].astype(jnp.float32)
                      ).astype(o_ref.dtype)


def _gemm_bias(patches, w_flat, bias, *, tm=256, tn=256, tk=512,
               out_dtype=None):
    """patches: (M, K), w_flat: (K, N), bias: (N,) -> (M, N)."""
    M, K = patches.shape
    K2, N = w_flat.shape
    assert K == K2, (K, K2)
    out_dtype = out_dtype or patches.dtype

    # Lane-dense padding: K and N go to multiples of 128 and of their tile
    # sizes; M goes to a multiple of 8 and of its tile size.
    Kp = _round_up(K, 128)
    tk_eff = min(tk, Kp)
    Kp = _round_up(Kp, tk_eff)

    Np = _round_up(N, 128)
    tn_eff = min(tn, Np)
    Np = _round_up(Np, tn_eff)

    tm_eff = min(tm, _round_up(M, 8))
    Mp = _round_up(M, tm_eff)

    if (Mp, Kp) != (M, K):
        patches = jnp.pad(patches, ((0, Mp - M), (0, Kp - K)))
    if (Kp, Np) != (K, N):
        w_flat = jnp.pad(w_flat, ((0, Kp - K), (0, Np - N)))
    bias2d = jnp.pad(bias, (0, Np - N)).reshape(1, Np)

    grid = (Mp // tm_eff, Np // tn_eff, Kp // tk_eff)

    itemsize = jnp.dtype(patches.dtype).itemsize
    cost = pl.CostEstimate(
        flops=2 * Mp * Kp * Np,
        transcendentals=0,
        bytes_accessed=(Mp * Kp * itemsize          # patches read
                        + Kp * Np * jnp.dtype(w_flat.dtype).itemsize
                        + Mp * Np * jnp.dtype(out_dtype).itemsize),
    )

    out = pl.pallas_call(
        _gemm_bias_kernel,
        out_shape=jax.ShapeDtypeStruct((Mp, Np), out_dtype),
        grid_spec=pltpu.PrefetchScalarGridSpec(
            num_scalar_prefetch=0,
            grid=grid,
            in_specs=[
                pl.BlockSpec((tm_eff, tk_eff), lambda i, j, k: (i, k)),
                pl.BlockSpec((tk_eff, tn_eff), lambda i, j, k: (k, j)),
                pl.BlockSpec((1, tn_eff), lambda i, j, k: (0, j)),
            ],
            out_specs=pl.BlockSpec((tm_eff, tn_eff), lambda i, j, k: (i, j)),
            scratch_shapes=[pltpu.VMEM((tm_eff, tn_eff), jnp.float32)],
        ),
        compiler_params=pltpu.CompilerParams(
            dimension_semantics=("parallel", "parallel", "arbitrary"),
        ),
        cost_estimate=cost,
    )(patches, w_flat, bias2d)
    return out[:M, :N]


# ---------------------------------------------------------------------------
# im2col glue (data movement only; no arithmetic)
# ---------------------------------------------------------------------------
def _im2col_nhwc(x, kh, kw, stride):
    B, H, W, C = x.shape
    Ho = (H - kh) // stride + 1
    Wo = (W - kw) // stride + 1
    cols = []
    for i in range(kh):
        for j in range(kw):
            cols.append(
                jax.lax.slice(
                    x,
                    (0, i, j, 0),
                    (B, i + (Ho - 1) * stride + 1, j + (Wo - 1) * stride + 1, C),
                    strides=(1, stride, stride, 1),
                )
            )
    # (B, Ho, Wo, KH*KW, C) -> (B*Ho*Wo, KH*KW*C); C innermost to match the
    # (KH, KW, Cin, Cout) weight flattening.
    patches = jnp.stack(cols, axis=3).reshape(B * Ho * Wo, kh * kw * C)
    return patches, Ho, Wo


# ---------------------------------------------------------------------------
# Downsample module (forward only)
# ---------------------------------------------------------------------------
class Downsample:
    def __init__(self, in_embed_dim, out_embed_dim, patch_size, kernel_size,
                 key, compute_dtype=None):
        self.in_dim = in_embed_dim
        self.out_dim = out_embed_dim
        self.stride = patch_size
        self.k = kernel_size
        # compute_dtype=jnp.bfloat16 halves GEMM traffic / doubles MXU rate
        # when precision allows; default None keeps the input dtype (f32 here).
        self.compute_dtype = compute_dtype
        kw_, kb_ = jax.random.split(key)
        fan_in = in_embed_dim * kernel_size * kernel_size
        bound = 1.0 / np.sqrt(fan_in)
        # PyTorch conv weight layout: (Cout, Cin, KH, KW)
        self.weight = jax.random.uniform(
            kw_, (out_embed_dim, in_embed_dim, kernel_size, kernel_size),
            minval=-bound, maxval=bound, dtype=jnp.float32)
        self.bias = jax.random.uniform(
            kb_, (out_embed_dim,), minval=-bound, maxval=bound,
            dtype=jnp.float32)

    @functools.partial(jax.jit, static_argnums=0)
    def __call__(self, x):
        # x: (B, H, W, Cin) NHWC — same tensor the PyTorch forward receives.
        B = x.shape[0]
        out_dtype = x.dtype
        patches, Ho, Wo = _im2col_nhwc(x, self.k, self.k, self.stride)
        # (Cout, Cin, KH, KW) -> (KH, KW, Cin, Cout) -> (KH*KW*Cin, Cout)
        w_flat = jnp.transpose(self.weight, (2, 3, 1, 0)).reshape(-1, self.out_dim)
        if self.compute_dtype is not None:
            patches = patches.astype(self.compute_dtype)
            w_flat = w_flat.astype(self.compute_dtype)
        out = _gemm_bias(patches, w_flat, self.bias, out_dtype=out_dtype)
        return out.reshape(B, Ho, Wo, self.out_dim)           # NHWC


# ---------------------------------------------------------------------------
# Reference (plain XLA conv) for correctness check
# ---------------------------------------------------------------------------
def _reference(x, weight, bias, stride):
    y = jax.lax.conv_general_dilated(
        x, weight,
        window_strides=(stride, stride),
        padding="VALID",
        dimension_numbers=("NHWC", "OIHW", "NHWC"),
    )
    return y + bias.reshape(1, 1, 1, -1)


if __name__ == "__main__":
    key = jax.random.PRNGKey(0)
    k_x, k_p = jax.random.split(key)

    in_embed_dim, out_embed_dim = 4, 8
    patch_size, kernel_size = 2, 3
    B, H, W = 2, 16, 16

    x = jax.random.normal(k_x, (B, H, W, in_embed_dim), dtype=jnp.float32)

    mod = Downsample(in_embed_dim, out_embed_dim, patch_size, kernel_size, k_p)
    out = jax.block_until_ready(mod(x))

    ref = jax.block_until_ready(_reference(x, mod.weight, mod.bias, patch_size))
    assert out.shape == ref.shape, (out.shape, ref.shape)
    np.testing.assert_allclose(np.asarray(out), np.asarray(ref),
                               atol=1e-4, rtol=1e-4)

    print("KERNEL_OK")
</pallas_src>

<mosaic_0001>
module attributes {stable_mosaic.version = 11 : i64} {
  func.func @_gemm_bias_kernel(%arg0: i32, %arg1: i32, %arg2: i32, %arg3: memref<104x128xf32, #tpu.memory_space<vmem>>, %arg4: memref<128x128xf32, #tpu.memory_space<vmem>>, %arg5: memref<1x128xf32, #tpu.memory_space<vmem>>, %arg6: memref<104x128xf32, #tpu.memory_space<vmem>>, %arg7: memref<104x128xf32, #tpu.memory_space<vmem>>) attributes {dimension_semantics = [#tpu.dimension_semantics<parallel>, #tpu.dimension_semantics<parallel>, #tpu.dimension_semantics<arbitrary>], iteration_bounds = array<i64: 1, 1, 1>, scalar_prefetch = 0 : i64, scratch_operands = 1 : i64, tpu.core_type = #tpu.core_type<tc>, window_params = [{transform_indices = @transform_0, window_bounds = array<i64: 104, 128>}, {transform_indices = @transform_1, window_bounds = array<i64: 128, 128>}, {transform_indices = @transform_2, window_bounds = array<i64: 1, 128>}, {transform_indices = @transform_3, window_bounds = array<i64: 104, 128>}]} {
    %c0_i32 = arith.constant 0 : i32
    %0 = arith.cmpi eq, %arg2, %c0_i32 : i32
    %1 = arith.extui %0 : i1 to i32
    %c0_i32_0 = arith.constant 0 : i32
    %2 = arith.cmpi ne, %1, %c0_i32_0 : i32
    scf.if %2 {
      %cst_10 = arith.constant 0.000000e+00 : f32
      %12 = vector.broadcast %cst_10 : f32 to vector<104x128xf32>
      %c0_11 = arith.constant 0 : index
      %c0_12 = arith.constant 0 : index
      %13 = vector.load %arg7[%c0_11, %c0_12] : memref<104x128xf32, #tpu.memory_space<vmem>>, vector<104x128xf32>
      tpu.vector_store %arg7[%c0_11, %c0_12], %12 {strides = array<i32>} : memref<104x128xf32, #tpu.memory_space<vmem>>, vector<104x128xf32>,
    } else {
    }
    %c0 = arith.constant 0 : index
    %c0_1 = arith.constant 0 : index
    %3 = vector.load %arg7[%c0, %c0_1] : memref<104x128xf32, #tpu.memory_space<vmem>>, vector<104x128xf32>
    %c0_2 = arith.constant 0 : index
    %c0_3 = arith.constant 0 : index
    %4 = vector.load %arg3[%c0_2, %c0_3] : memref<104x128xf32, #tpu.memory_space<vmem>>, vector<104x128xf32>
    %c0_4 = arith.constant 0 : index
    %c0_5 = arith.constant 0 : index
    %5 = vector.load %arg4[%c0_4, %c0_5] : memref<128x128xf32, #tpu.memory_space<vmem>>, vector<128x128xf32>
    %cst = arith.constant dense<0.000000e+00> : vector<104x128xf32>
    %6 = tpu.matmul %4, %5, %cst {dimension_numbers = #tpu.dot_dimension_numbers<[1], [0], [0], [1], [0, 0, 1, 1], [], []>} : vector<104x128xf32>, vector<128x128xf32>, vector<104x128xf32> -> vector<104x128xf32>
    %7 = arith.addf %3, %6 : vector<104x128xf32>
    %c0_6 = arith.constant 0 : index
    %c0_7 = arith.constant 0 : index
    %8 = vector.load %arg7[%c0_6, %c0_7] : memref<104x128xf32, #tpu.memory_space<vmem>>, vector<104x128xf32>
    tpu.vector_store %arg7[%c0_6, %c0_7], %7 {strides = array<i32>} : memref<104x128xf32, #tpu.memory_space<vmem>>, vector<104x128xf32>,
    %c0_i32_8 = arith.constant 0 : i32
    %9 = arith.cmpi eq, %arg2, %c0_i32_8 : i32
    %10 = arith.extui %9 : i1 to i32
    %c0_i32_9 = arith.constant 0 : i32
    %11 = arith.cmpi ne, %10, %c0_i32_9 : i32
    scf.if %11 {
      %c0_10 = arith.constant 0 : index
      %c0_11 = arith.constant 0 : index
      %12 = vector.load %arg7[%c0_10, %c0_11] : memref<104x128xf32, #tpu.memory_space<vmem>>, vector<104x128xf32>
      %c0_12 = arith.constant 0 : index
      %c0_13 = arith.constant 0 : index
      %13 = vector.load %arg5[%c0_12, %c0_13] : memref<1x128xf32, #tpu.memory_space<vmem>>, vector<1x128xf32>
      %14 = vector.broadcast %13 : vector<1x128xf32> to vector<104x128xf32>
      %15 = arith.addf %12, %14 : vector<104x128xf32>
      %c0_14 = arith.constant 0 : index
      %c0_15 = arith.constant 0 : index
      %16 = vector.load %arg6[%c0_14, %c0_15] : memref<104x128xf32, #tpu.memory_space<vmem>>, vector<104x128xf32>
      tpu.vector_store %arg6[%c0_14, %c0_15], %15 {strides = array<i32>} : memref<104x128xf32, #tpu.memory_space<vmem>>, vector<104x128xf32>,
    } else {
    }
    return
  }
  func.func @transform_0(%arg0: i32, %arg1: i32, %arg2: i32) -> (i32, i32) {
    %c0_i32 = arith.constant 0 : i32
    return %arg0, %arg2 : i32, i32
  }
  func.func @transform_1(%arg0: i32, %arg1: i32, %arg2: i32) -> (i32, i32) {
    %c0_i32 = arith.constant 0 : i32
    return %arg2, %arg1 : i32, i32
  }
  func.func @transform_2(%arg0: i32, %arg1: i32, %arg2: i32) -> (i32, i32) {
    %c0_i32 = arith.constant 0 : i32
    %c0_i32_0 = arith.constant 0 : i32
    return %c0_i32, %arg1 : i32, i32
  }
  func.func @transform_3(%arg0: i32, %arg1: i32, %arg2: i32) -> (i32, i32) {
    %c0_i32 = arith.constant 0 : i32
    return %arg0, %arg1 : i32, i32
  }
}

</mosaic_0001>

<llo_original>
// kernel: a_call__.1
$region0: #{a_call__.1}
  #allocation0 [shape = 'u32[]', space=smem, size = 0x4, offset = 0x4, fixed_abs, tag = 'smem constant byte address 0x4 - core index']
  #allocation1 [shape = 'u32[144,128]{1,0:T(1,128)}', space=vmem, size = 0x12000, scoped, tag = 'internal scratch']
  #allocation2 [shape = 'f32[104,128]{1,0:T(8,128)}', space=vmem, size = 0xd000, scoped, tag = 'scratch operand']
  %s0 = inlined_call_operand.vmem [shape: f32[104,128], index: 0, kind: input, shape index: {}]
  %s1 = inlined_call_operand.vmem [shape: f32[128,128], index: 1, kind: input, shape index: {}]
  %s2 = inlined_call_operand.vmem [shape: f32[1,128], index: 2, kind: input, shape index: {}]
  %s3 = inlined_call_operand.vmem [shape: f32[104,128], index: 3, kind: output, shape index: {}]
  %s4 = sld [smem:[#allocation0]]
  $region30: #{a_call__.1} parent=0
    _
  %s6 = ssub.s32 1, %s4
  %s7 = scalar_select 0, %s6, %s4
  // Predicated region
  $region2: #{a_call__.1} parent=0 // pred_check
    _
  $region3: #{a_call__.1} parent=0 // pred_check_branch
    %9 = sbr.rel (0) target = $region5
  $region4: #{a_call__.1} parent=0 // pred_region
    _
  $region5: #{a_call__.1} parent=0 // pred_fallthru
    _
  // Predicated region
  $region6: #{a_call__.1} parent=0 // pred_check
    _
  $region7: #{a_call__.1} parent=0 // pred_check_branch
    %11 = sbr.rel (0) target = $region9
  $region8: #{a_call__.1} parent=0 // pred_region
    _
  $region9: #{a_call__.1} parent=0 // pred_fallthru
    _
  // Predicated region
  $region10: #{a_call__.1} parent=0 // pred_check
    _
  $region11: #{a_call__.1} parent=0 // pred_check_branch
    %13 = sbr.rel (0) target = $region13
  $region12: #{a_call__.1} parent=0 // pred_region
    _
  $region13: #{a_call__.1} parent=0 // pred_fallthru
    _
  %p14 = scmp.eq.s32.totalorder 0, 0
  // Predicated region
  $region14: #{a_call__.1} parent=0 // pred_check
    %p15 = pneg %p14
  $region15: #{a_call__.1} parent=0 // pred_check_branch
    %17 = sbr.rel (%p15) target = $region17
  $region16: #{a_call__.1} parent=0 // pred_region
    %18 = vst [vmem:[#allocation2] sm:$0xff] 0.0
    %19 = vst [vmem:[#allocation2 + $0x8] sm:$0xff] 0.0
    %20 = vst [vmem:[#allocation2 + $0x10] sm:$0xff] 0.0
    %21 = vst [vmem:[#allocation2 + $0x18] sm:$0xff] 0.0
    %22 = vst [vmem:[#allocation2 + $0x20] sm:$0xff] 0.0
    %23 = vst [vmem:[#allocation2 + $0x28] sm:$0xff] 0.0
    %24 = vst [vmem:[#allocation2 + $0x30] sm:$0xff] 0.0
    %25 = vst [vmem:[#allocation2 + $0x38] sm:$0xff] 0.0
    %26 = vst [vmem:[#allocation2 + $0x40] sm:$0xff] 0.0
    %27 = vst [vmem:[#allocation2 + $0x48] sm:$0xff] 0.0
    %28 = vst [vmem:[#allocation2 + $0x50] sm:$0xff] 0.0
    %29 = vst [vmem:[#allocation2 + $0x58] sm:$0xff] 0.0
    %30 = vst [vmem:[#allocation2 + $0x60] sm:$0xff] 0.0
  $region17: #{a_call__.1} parent=0 // pred_fallthru
    _
  %v31 = vld [vmem:[#allocation2] sm:$0xff]
  %v32 = vld [vmem:[#allocation2 + $0x8] sm:$0xff]
  %v33 = vld [vmem:[#allocation2 + $0x10] sm:$0xff]
  %v34 = vld [vmem:[#allocation2 + $0x18] sm:$0xff]
  %v35 = vld [vmem:[#allocation2 + $0x20] sm:$0xff]
  %v36 = vld [vmem:[#allocation2 + $0x28] sm:$0xff]
  %v37 = vld [vmem:[#allocation2 + $0x30] sm:$0xff]
  %v38 = vld [vmem:[#allocation2 + $0x38] sm:$0xff]
  %v39 = vld [vmem:[#allocation2 + $0x40] sm:$0xff]
  %v40 = vld [vmem:[#allocation2 + $0x48] sm:$0xff]
  %v41 = vld [vmem:[#allocation2 + $0x50] sm:$0xff]
  %v42 = vld [vmem:[#allocation2 + $0x58] sm:$0xff]
  %v43 = vld [vmem:[#allocation2 + $0x60] sm:$0xff]
  %v44 = vld [vmem:[%s0] sm:$0xff]
  %v45 = vld [vmem:[%s0 + $0x8] sm:$0xff]
  %v46 = vld [vmem:[%s0 + $0x10] sm:$0xff]
  %v47 = vld [vmem:[%s0 + $0x18] sm:$0xff]
  %v48 = vld [vmem:[%s0 + $0x20] sm:$0xff]
  %v49 = vld [vmem:[%s0 + $0x28] sm:$0xff]
  %v50 = vld [vmem:[%s0 + $0x30] sm:$0xff]
  %v51 = vld [vmem:[%s0 + $0x38] sm:$0xff]
  %v52 = vld [vmem:[%s0 + $0x40] sm:$0xff]
  %v53 = vld [vmem:[%s0 + $0x48] sm:$0xff]
  %v54 = vld [vmem:[%s0 + $0x50] sm:$0xff]
  %v55 = vld [vmem:[%s0 + $0x58] sm:$0xff]
  %v56 = vld [vmem:[%s0 + $0x60] sm:$0xff]
  %v57 = vld [vmem:[%s1] sm:$0xff]
  %v58 = vld [vmem:[%s1 + $0x8] sm:$0xff]
  %v59 = vld [vmem:[%s1 + $0x10] sm:$0xff]
  %v60 = vld [vmem:[%s1 + $0x18] sm:$0xff]
  %v61 = vld [vmem:[%s1 + $0x20] sm:$0xff]
  %v62 = vld [vmem:[%s1 + $0x28] sm:$0xff]
  %v63 = vld [vmem:[%s1 + $0x30] sm:$0xff]
  %v64 = vld [vmem:[%s1 + $0x38] sm:$0xff]
  %v65 = vld [vmem:[%s1 + $0x40] sm:$0xff]
  %v66 = vld [vmem:[%s1 + $0x48] sm:$0xff]
  %v67 = vld [vmem:[%s1 + $0x50] sm:$0xff]
  %v68 = vld [vmem:[%s1 + $0x58] sm:$0xff]
  %v69 = vld [vmem:[%s1 + $0x60] sm:$0xff]
  %v70 = vld [vmem:[%s1 + $0x68] sm:$0xff]
  %v71 = vld [vmem:[%s1 + $0x70] sm:$0xff]
  %v72 = vld [vmem:[%s1 + $0x78] sm:$0xff]
  %73 = vmatprep.subr.mxu0 0.0
  %74 = vmatpush1.msra.mxu0 %v72
  %75 = vmatprep.subr.mxu0 0.0
  %76 = vmatpush1.msra.mxu0 %v71
  %77 = vmatprep.subr.mxu0 0.0
  %78 = vmatpush1.msra.mxu0 %v70
  %79 = vmatprep.subr.mxu0 0.0
  %80 = vmatpush1.msra.mxu0 %v69
  %81 = vmatprep.subr.mxu0 0.0
  %82 = vmatpush1.msra.mxu0 %v68
  %83 = vmatprep.subr.mxu0 0.0
  %84 = vmatpush1.msra.mxu0 %v67
  %85 = vmatprep.subr.mxu0 0.0
  %86 = vmatpush1.msra.mxu0 %v66
  %87 = vmatprep.subr.mxu0 0.0
  %88 = vmatpush1.msra.mxu0 %v65
  %89 = vmatprep.subr.mxu0 0.0
  %90 = vmatpush1.msra.mxu0 %v64
  %91 = vmatprep.subr.mxu0 0.0
  %92 = vmatpush1.msra.mxu0 %v63
  %93 = vmatprep.subr.mxu0 0.0
  %94 = vmatpush1.msra.mxu0 %v62
  %95 = vmatprep.subr.mxu0 0.0
  %96 = vmatpush1.msra.mxu0 %v61
  %97 = vmatprep.subr.mxu0 0.0
  %98 = vmatpush1.msra.mxu0 %v60
  %99 = vmatprep.subr.mxu0 0.0
  %100 = vmatpush1.msra.mxu0 %v59
  %101 = vmatprep.subr.mxu0 0.0
  %102 = vmatpush1.msra.mxu0 %v58
  %103 = vmatprep.subr.mxu0 0.0
  %104 = vmatpush1.msra.mxu0 %v57
  %105 = vmatprep.subr.mxu0 0.0
  %106 = vmatpush2.msra.mxu0 0.0
  %107 = vmatprep.subr.mxu0 0.0
  %108 = vmatpush2.msra.mxu0 0.0
  %109 = vmatprep.subr.mxu0 0.0
  %110 = vmatpush2.msra.mxu0 0.0
  %111 = vmatprep.subr.mxu0 0.0
  %112 = vmatpush2.msra.mxu0 0.0
  %113 = vmatprep.subr.mxu0 0.0
  %114 = vmatpush2.msra.mxu0 0.0
  %115 = vmatprep.subr.mxu0 0.0
  %116 = vmatpush2.msra.mxu0 0.0
  %117 = vmatprep.subr.mxu0 0.0
  %118 = vmatpush2.msra.mxu0 0.0
  %119 = vmatprep.subr.mxu0 0.0
  %120 = vmatpush2.msra.mxu0 0.0
  %121 = vmatprep.subr.mxu0 0.0
  %122 = vmatpush2.msra.mxu0 0.0
  %123 = vmatprep.subr.mxu0 0.0
  %124 = vmatpush2.msra.mxu0 0.0
  %125 = vmatprep.subr.mxu0 0.0
  %126 = vmatpush2.msra.mxu0 0.0
  %127 = vmatprep.subr.mxu0 0.0
  %128 = vmatpush2.msra.mxu0 0.0
  %129 = vmatprep.subr.mxu0 0.0
  %130 = vmatpush2.msra.mxu0 0.0
  %131 = vmatprep.subr.mxu0 0.0
  %132 = vmatpush2.msra.mxu0 0.0
  %133 = vmatprep.subr.mxu0 0.0
  %134 = vmatpush2.msra.mxu0 0.0
  %135 = vmatprep.subr.mxu0 0.0
  %136 = vmatpush2.msra.mxu0 0.0
  %137 = vmatprep.mubr.f32.mxu0 0.0
  %138 = vmatmul.mubr.f32.gmra.mxu0 %v44
  %v139 = vpop.f32.mrf.mxu0
  %v140 = vadd.f32 0.0, %v139
  %v141 = vpop.f32.mrf.mxu0
  %142 = vmatprep.mubr.f32.mxu0 0.0
  %143 = vmatmul.mubr.f32.gmra.mxu0 %v45
  %v144 = vpop.f32.mrf.mxu0
  %v145 = vadd.f32 0.0, %v144
  %v146 = vpop.f32.mrf.mxu0
  %147 = vmatprep.mubr.f32.mxu0 0.0
  %148 = vmatmul.mubr.f32.gmra.mxu0 %v46
  %v149 = vpop.f32.mrf.mxu0
  %v150 = vadd.f32 0.0, %v149
  %v151 = vpop.f32.mrf.mxu0
  %152 = vmatprep.mubr.f32.mxu0 0.0
  %153 = vmatmul.mubr.f32.gmra.mxu0 %v47
  %v154 = vpop.f32.mrf.mxu0
  %v155 = vadd.f32 0.0, %v154
  %v156 = vpop.f32.mrf.mxu0
  %157 = vmatprep.mubr.f32.mxu0 0.0
  %158 = vmatmul.mubr.f32.gmra.mxu0 %v48
  %v159 = vpop.f32.mrf.mxu0
  %v160 = vadd.f32 0.0, %v159
  %v161 = vpop.f32.mrf.mxu0
  %162 = vmatprep.mubr.f32.mxu0 0.0
  %163 = vmatmul.mubr.f32.gmra.mxu0 %v49
  %v164 = vpop.f32.mrf.mxu0
  %v165 = vadd.f32 0.0, %v164
  %v166 = vpop.f32.mrf.mxu0
  %167 = vmatprep.mubr.f32.mxu0 0.0
  %168 = vmatmul.mubr.f32.gmra.mxu0 %v50
  %v169 = vpop.f32.mrf.mxu0
  %v170 = vadd.f32 0.0, %v169
  %v171 = vpop.f32.mrf.mxu0
  %172 = vmatprep.mubr.f32.mxu0 0.0
  %173 = vmatmul.mubr.f32.gmra.mxu0 %v51
  %v174 = vpop.f32.mrf.mxu0
  %v175 = vadd.f32 0.0, %v174
  %v176 = vpop.f32.mrf.mxu0
  %177 = vmatprep.mubr.f32.mxu0 0.0
  %178 = vmatmul.mubr.f32.gmra.mxu0 %v52
  %v179 = vpop.f32.mrf.mxu0
  %v180 = vadd.f32 0.0, %v179
  %v181 = vpop.f32.mrf.mxu0
  %182 = vmatprep.mubr.f32.mxu0 0.0
  %183 = vmatmul.mubr.f32.gmra.mxu0 %v53
  %v184 = vpop.f32.mrf.mxu0
  %v185 = vadd.f32 0.0, %v184
  %v186 = vpop.f32.mrf.mxu0
  %187 = vmatprep.mubr.f32.mxu0 0.0
  %188 = vmatmul.mubr.f32.gmra.mxu0 %v54
  %v189 = vpop.f32.mrf.mxu0
  %v190 = vadd.f32 0.0, %v189
  %v191 = vpop.f32.mrf.mxu0
  %192 = vmatprep.mubr.f32.mxu0 0.0
  %193 = vmatmul.mubr.f32.gmra.mxu0 %v55
  %v194 = vpop.f32.mrf.mxu0
  %v195 = vadd.f32 0.0, %v194
  %v196 = vpop.f32.mrf.mxu0
  %197 = vmatprep.mubr.f32.mxu0 0.0
  %198 = vmatmul.mubr.f32.gmra.mxu0 %v56
  %v199 = vpop.f32.mrf.mxu0
  %v200 = vadd.f32 0.0, %v199
  %v201 = vpop.f32.mrf.mxu0
  %202 = vdwg.mxu0
  %v203 = vadd.f32 %v31, %v140
  %v204 = vadd.f32 %v32, %v145
  %v205 = vadd.f32 %v33, %v150
  %v206 = vadd.f32 %v34, %v155
  %v207 = vadd.f32 %v35, %v160
  %v208 = vadd.f32 %v36, %v165
  %v209 = vadd.f32 %v37, %v170
  %v210 = vadd.f32 %v38, %v175
  %v211 = vadd.f32 %v39, %v180
  %v212 = vadd.f32 %v40, %v185
  %v213 = vadd.f32 %v41, %v190
  %v214 = vadd.f32 %v42, %v195
  %v215 = vadd.f32 %v43, %v200
  %216 = vst [vmem:[#allocation2] sm:$0xff] %v203
  %217 = vst [vmem:[#allocation2 + $0x8] sm:$0xff] %v204
  %218 = vst [vmem:[#allocation2 + $0x10] sm:$0xff] %v205
  %219 = vst [vmem:[#allocation2 + $0x18] sm:$0xff] %v206
  %220 = vst [vmem:[#allocation2 + $0x20] sm:$0xff] %v207
  %221 = vst [vmem:[#allocation2 + $0x28] sm:$0xff] %v208
  %222 = vst [vmem:[#allocation2 + $0x30] sm:$0xff] %v209
  %223 = vst [vmem:[#allocation2 + $0x38] sm:$0xff] %v210
  %224 = vst [vmem:[#allocation2 + $0x40] sm:$0xff] %v211
  %225 = vst [vmem:[#allocation2 + $0x48] sm:$0xff] %v212
  %226 = vst [vmem:[#allocation2 + $0x50] sm:$0xff] %v213
  %227 = vst [vmem:[#allocation2 + $0x58] sm:$0xff] %v214
  %228 = vst [vmem:[#allocation2 + $0x60] sm:$0xff] %v215
  // Predicated region
  $region18: #{a_call__.1} parent=0 // pred_check
    %p229 = pneg %p14
  $region19: #{a_call__.1} parent=0 // pred_check_branch
    %231 = sbr.rel (%p229) target = $region21
  $region20: #{a_call__.1} parent=0 // pred_region
    %v232 = vld [vmem:[#allocation2] sm:$0xff]
    %v233 = vld [vmem:[#allocation2 + $0x8] sm:$0xff]
    %v234 = vld [vmem:[#allocation2 + $0x10] sm:$0xff]
    %v235 = vld [vmem:[#allocation2 + $0x18] sm:$0xff]
    %v236 = vld [vmem:[#allocation2 + $0x20] sm:$0xff]
    %v237 = vld [vmem:[#allocation2 + $0x28] sm:$0xff]
    %v238 = vld [vmem:[#allocation2 + $0x30] sm:$0xff]
    %v239 = vld [vmem:[#allocation2 + $0x38] sm:$0xff]
    %v240 = vld [vmem:[#allocation2 + $0x40] sm:$0xff]
    %v241 = vld [vmem:[#allocation2 + $0x48] sm:$0xff]
    %v242 = vld [vmem:[#allocation2 + $0x50] sm:$0xff]
    %v243 = vld [vmem:[#allocation2 + $0x58] sm:$0xff]
    %v244 = vld [vmem:[#allocation2 + $0x60] sm:$0xff]
    %v245 = vld [vmem:[%s2] sm:$0x1]
    %v247 = vlaneseq
    %v248 = vshrl.u32 %v247, 7
    %v249 = vsub.s32 0, %v248
    %v250 = vrot.slane %v245, %v249
    %v252 = vadd.f32 %v232, %v250
    %v253 = vadd.f32 %v233, %v250
    %v254 = vadd.f32 %v234, %v250
    %v255 = vadd.f32 %v235, %v250
    %v256 = vadd.f32 %v236, %v250
    %v257 = vadd.f32 %v237, %v250
    %v258 = vadd.f32 %v238, %v250
    %v259 = vadd.f32 %v239, %v250
    %v260 = vadd.f32 %v240, %v250
    %v261 = vadd.f32 %v241, %v250
    %v262 = vadd.f32 %v242, %v250
    %v263 = vadd.f32 %v243, %v250
    %v264 = vadd.f32 %v244, %v250
    %265 = vst [vmem:[%s3] sm:$0xff] %v252
    %266 = vst [vmem:[%s3 + $0x8] sm:$0xff] %v253
    %267 = vst [vmem:[%s3 + $0x10] sm:$0xff] %v254
    %268 = vst [vmem:[%s3 + $0x18] sm:$0xff] %v255
    %269 = vst [vmem:[%s3 + $0x20] sm:$0xff] %v256
    %270 = vst [vmem:[%s3 + $0x28] sm:$0xff] %v257
    %271 = vst [vmem:[%s3 + $0x30] sm:$0xff] %v258
    %272 = vst [vmem:[%s3 + $0x38] sm:$0xff] %v259
    %273 = vst [vmem:[%s3 + $0x40] sm:$0xff] %v260
    %274 = vst [vmem:[%s3 + $0x48] sm:$0xff] %v261
    %275 = vst [vmem:[%s3 + $0x50] sm:$0xff] %v262
    %276 = vst [vmem:[%s3 + $0x58] sm:$0xff] %v263
    %277 = vst [vmem:[%s3 + $0x60] sm:$0xff] %v264
  $region21: #{a_call__.1} parent=0 // pred_fallthru
    _
  // Predicated region
  $region22: #{a_call__.1} parent=0 // pred_check
    _
  $region23: #{a_call__.1} parent=0 // pred_check_branch
    %279 = sbr.rel (0) target = $region25
  $region24: #{a_call__.1} parent=0 // pred_region
    _
  $region25: #{a_call__.1} parent=0 // pred_fallthru
    _
  // Predicated region
  $region26: #{a_call__.1} parent=0 // pred_check
    _
  $region27: #{a_call__.1} parent=0 // pred_check_branch
    %281 = sbr.rel (0) target = $region29
  $region28: #{a_call__.1} parent=0 // pred_region
    _
  $region29: #{a_call__.1} parent=0 // pred_fallthru
    _

</llo_original>
